<compile_context>
chip_gen: v7x
topology: tpu7x:2x2x1
jax: 0.10.0
libtpu: 0.0.40
codegen_flags: <defaults>
</compile_context>

<pallas_src>
import jax
import jax.numpy as jnp
from jax import lax
from jax.experimental import pallas as pl
from jax.experimental.pallas import tpu as pltpu


def value_net_kernel(x_ref, w1t_ref, b1_ref, w2t_ref, b2_ref, w3_ref, b3_ref,
                     out_ref):
    x = x_ref[...]                                      # (TB, S) f32, as stored in HBM

    # Layer 1: (H, S) @ (TB, S)^T -> (H, TB); the MXU absorbs the transpose.
    h1 = lax.dot_general(w1t_ref[...], x, (((1,), (1,)), ((), ())),
                         preferred_element_type=jnp.float32)
    h1 = jnp.tanh(h1 + b1_ref[...])                     # (H, TB) + (H, 1), lane-dense

    # Layer 2: (H, H) @ (H, TB) -> (H, TB), standard MXU matmul.
    h2 = lax.dot_general(w2t_ref[...], h1, (((1,), (0,)), ((), ())),
                         preferred_element_type=jnp.float32)
    h2 = jnp.tanh(h2 + b2_ref[...])

    # Layer 3 (N=1 head): VPU multiply + sublane reduce; keeps the MXU out of an
    # M=1 matmul.  Result (1, TB) is lane-dense.
    v = jnp.sum(h2 * w3_ref[...], axis=0, keepdims=True) + b3_ref[0, 0]

    out_ref[...] = v[None]                              # (1, 1, TB) lane-dense store


def _pick_tiling(batch, max_block_rows):
    """Rows-per-tile (multiple of 8) and tile count.

    Keeps num_tiles >= 2 (and even) whenever the batch allows, so the
    "parallel" batch axis actually shards across both v7x TensorCores.
    """
    if batch <= 8:
        return batch, 1
    nt = pl.cdiv(batch, max_block_rows)
    if nt == 1:
        nt = 2
    if nt % 2:
        nt += 1
    tb = pl.cdiv(batch, nt)
    tb = pl.cdiv(tb, 8) * 8            # sublane-aligned block rows
    nt = pl.cdiv(batch, tb)
    return tb, nt


def value_network_forward(x, params, *, block_rows=1024):
    """x: [batch, state_dim] float32 -> [batch, 1] float32."""
    w1, b1, w2, b2, w3, b3 = params
    batch, state_dim = x.shape
    hidden = w1.shape[1]

    tb, num_tiles = _pick_tiling(batch, block_rows)

    # Feature-major parameter layouts (tiny; VMEM-resident across all steps).
    w1_t = w1.T                            # (hidden, state_dim)
    w2_t = w2.T                            # (hidden, hidden)
    b1_c = b1.reshape(hidden, 1)
    b2_c = b2.reshape(hidden, 1)
    w3_c = w3.reshape(hidden, 1)
    b3_s = b3.reshape(1, 1)

    cost = pl.CostEstimate(
        flops=2 * batch * (state_dim * hidden + hidden * hidden + hidden),
        transcendentals=2 * batch * hidden,
        bytes_accessed=(x.size + batch) * 4
        + (w1.size + w2.size + w3.size + 2 * hidden + 1) * 4,
    )

    out = pl.pallas_call(
        value_net_kernel,
        out_shape=jax.ShapeDtypeStruct((num_tiles, 1, tb), jnp.float32),
        grid_spec=pltpu.PrefetchScalarGridSpec(
            num_scalar_prefetch=0,
            grid=(num_tiles,),
            in_specs=[
                pl.BlockSpec((tb, state_dim), lambda i: (i, 0)),       # x tile
                pl.BlockSpec((hidden, state_dim), lambda i: (0, 0)),   # w1^T (resident)
                pl.BlockSpec((hidden, 1), lambda i: (0, 0)),           # b1
                pl.BlockSpec((hidden, hidden), lambda i: (0, 0)),      # w2^T
                pl.BlockSpec((hidden, 1), lambda i: (0, 0)),           # b2
                pl.BlockSpec((hidden, 1), lambda i: (0, 0)),           # w3
                pl.BlockSpec(memory_space=pltpu.MemorySpace.SMEM),     # b3 scalar
            ],
            out_specs=pl.BlockSpec((1, 1, tb), lambda i: (i, 0, 0)),
        ),
        compiler_params=pltpu.CompilerParams(
            dimension_semantics=("parallel",),
        ),
        cost_estimate=cost,
    )(x, w1_t, b1_c, w2_t, b2_c, w3_c, b3_s)

    # (num_tiles, 1, tb) -> (batch, 1).  Contiguous reshape; the tail slice is a
    # few KB and only present when tb does not divide batch.
    return out.reshape(num_tiles * tb)[:batch].reshape(batch, 1)


def init_params(key, state_dim, hidden_dim):
    """PyTorch-style uniform(-1/sqrt(fan_in), 1/sqrt(fan_in)) init.

    Weights stored as [in_features, out_features]; biases as [out_features].
    """
    def layer(k, fan_in, fan_out):
        kw, kb = jax.random.split(k)
        bound = 1.0 / jnp.sqrt(jnp.float32(fan_in))
        w = jax.random.uniform(kw, (fan_in, fan_out), jnp.float32, -bound, bound)
        b = jax.random.uniform(kb, (fan_out,), jnp.float32, -bound, bound)
        return w, b

    k1, k2, k3 = jax.random.split(key, 3)
    w1, b1 = layer(k1, state_dim, hidden_dim)
    w2, b2 = layer(k2, hidden_dim, hidden_dim)
    w3, b3 = layer(k3, hidden_dim, 1)
    return (w1, b1, w2, b2, w3, b3)


def reference_forward(x, params):
    w1, b1, w2, b2, w3, b3 = params
    h1 = jnp.tanh(x @ w1 + b1)
    h2 = jnp.tanh(h1 @ w2 + b2)
    return h2 @ w3 + b3


if __name__ == "__main__":
    # Config implied by the module: state_dim=27 (TensorType['batch', 27]),
    # hidden_dim=32.  batch=300 exercises two parallel tiles + a ragged edge.
    state_dim = 27
    hidden_dim = 32
    batch = 300

    key = jax.random.PRNGKey(0)
    k_x, k_p = jax.random.split(key)

    x = jax.random.normal(k_x, (batch, state_dim), dtype=jnp.float32)
    params = init_params(k_p, state_dim, hidden_dim)

    out = jax.block_until_ready(value_network_forward(x, params))
    ref = reference_forward(x, params)

    assert out.shape == (batch, 1), out.shape
    # All-f32 compute -> tight tolerance vs. the f32 reference.
    max_err = float(jnp.max(jnp.abs(out - ref)))
    assert max_err < 1e-4, f"max abs err = {max_err}"

    print("KERNEL_OK")
</pallas_src>

<mosaic_0001>
module attributes {stable_mosaic.version = 11 : i64} {
  func.func @value_net_kernel(%arg0: i32, %arg1: memref<152x27xf32, #tpu.memory_space<vmem>>, %arg2: memref<32x27xf32, #tpu.memory_space<vmem>>, %arg3: memref<32x1xf32, #tpu.memory_space<vmem>>, %arg4: memref<32x32xf32, #tpu.memory_space<vmem>>, %arg5: memref<32x1xf32, #tpu.memory_space<vmem>>, %arg6: memref<32x1xf32, #tpu.memory_space<vmem>>, %arg7: memref<1x1xf32, #tpu.memory_space<smem>>, %arg8: memref<1x1x152xf32, #tpu.memory_space<vmem>>) attributes {dimension_semantics = [#tpu.dimension_semantics<parallel>], iteration_bounds = array<i64: 2>, scalar_prefetch = 0 : i64, scratch_operands = 0 : i64, tpu.core_type = #tpu.core_type<tc>, window_params = [{transform_indices = @transform_0, window_bounds = array<i64: 152, 27>}, {pipeline_mode = #tpu.pipeline_mode<synchronous>, transform_indices = @transform_1, window_bounds = array<i64: 32, 27>}, {pipeline_mode = #tpu.pipeline_mode<synchronous>, transform_indices = @transform_2, window_bounds = array<i64: 32, 1>}, {pipeline_mode = #tpu.pipeline_mode<synchronous>, transform_indices = @transform_3, window_bounds = array<i64: 32, 32>}, {pipeline_mode = #tpu.pipeline_mode<synchronous>, transform_indices = @transform_4, window_bounds = array<i64: 32, 1>}, {pipeline_mode = #tpu.pipeline_mode<synchronous>, transform_indices = @transform_5, window_bounds = array<i64: 32, 1>}, {transform_indices = @transform_6, window_bounds = array<i64: 1, 1>}, {transform_indices = @transform_7, window_bounds = array<i64: 1, 1, 152>}]} {
    %c0 = arith.constant 0 : index
    %c0_0 = arith.constant 0 : index
    %0 = vector.load %arg1[%c0, %c0_0] : memref<152x27xf32, #tpu.memory_space<vmem>>, vector<152x27xf32>
    %c0_1 = arith.constant 0 : index
    %c0_2 = arith.constant 0 : index
    %1 = vector.load %arg2[%c0_1, %c0_2] : memref<32x27xf32, #tpu.memory_space<vmem>>, vector<32x27xf32>
    %cst = arith.constant dense<0.000000e+00> : vector<32x152xf32>
    %2 = tpu.matmul %1, %0, %cst {dimension_numbers = #tpu.dot_dimension_numbers<[1], [1], [0], [0], [0, 0, 1, 0], [], []>} : vector<32x27xf32>, vector<152x27xf32>, vector<32x152xf32> -> vector<32x152xf32>
    %c0_3 = arith.constant 0 : index
    %c0_4 = arith.constant 0 : index
    %3 = vector.load %arg3[%c0_3, %c0_4] : memref<32x1xf32, #tpu.memory_space<vmem>>, vector<32x1xf32>
    %4 = vector.broadcast %3 : vector<32x1xf32> to vector<32x152xf32>
    %5 = arith.addf %2, %4 : vector<32x152xf32>
    %6 = math.tanh %5 : vector<32x152xf32>
    %c0_5 = arith.constant 0 : index
    %c0_6 = arith.constant 0 : index
    %7 = vector.load %arg4[%c0_5, %c0_6] : memref<32x32xf32, #tpu.memory_space<vmem>>, vector<32x32xf32>
    %cst_7 = arith.constant dense<0.000000e+00> : vector<32x152xf32>
    %8 = tpu.matmul %7, %6, %cst_7 {dimension_numbers = #tpu.dot_dimension_numbers<[1], [0], [0], [1], [0, 0, 1, 1], [], []>} : vector<32x32xf32>, vector<32x152xf32>, vector<32x152xf32> -> vector<32x152xf32>
    %c0_8 = arith.constant 0 : index
    %c0_9 = arith.constant 0 : index
    %9 = vector.load %arg5[%c0_8, %c0_9] : memref<32x1xf32, #tpu.memory_space<vmem>>, vector<32x1xf32>
    %10 = vector.broadcast %9 : vector<32x1xf32> to vector<32x152xf32>
    %11 = arith.addf %8, %10 : vector<32x152xf32>
    %12 = math.tanh %11 : vector<32x152xf32>
    %c0_10 = arith.constant 0 : index
    %c0_11 = arith.constant 0 : index
    %13 = vector.load %arg6[%c0_10, %c0_11] : memref<32x1xf32, #tpu.memory_space<vmem>>, vector<32x1xf32>
    %14 = vector.broadcast %13 : vector<32x1xf32> to vector<32x152xf32>
    %15 = arith.mulf %12, %14 : vector<32x152xf32>
    %cst_12 = arith.constant dense<0.000000e+00> : vector<152xf32>
    %16 = vector.multi_reduction <add>, %15, %cst_12 [0] : vector<32x152xf32> to vector<152xf32>
    %17 = vector.shape_cast %16 : vector<152xf32> to vector<1x152xf32>
    %c0_13 = arith.constant 0 : index
    %c0_14 = arith.constant 0 : index
    %18 = memref.load %arg7[%c0_13, %c0_14] : memref<1x1xf32, #tpu.memory_space<smem>>
    %19 = vector.broadcast %18 : f32 to vector<1x152xf32>
    %20 = arith.addf %17, %19 : vector<1x152xf32>
    %21 = vector.shape_cast %20 : vector<1x152xf32> to vector<1x1x152xf32>
    %c0_15 = arith.constant 0 : index
    %c0_16 = arith.constant 0 : index
    %c0_17 = arith.constant 0 : index
    %22 = vector.load %arg8[%c0_15, %c0_16, %c0_17] : memref<1x1x152xf32, #tpu.memory_space<vmem>>, vector<1x1x152xf32>
    tpu.vector_store %arg8[%c0_15, %c0_16, %c0_17], %21 {strides = array<i32>} : memref<1x1x152xf32, #tpu.memory_space<vmem>>, vector<1x1x152xf32>,
    return
  }
  func.func @transform_0(%arg0: i32) -> (i32, i32) {
    %c0_i32 = arith.constant 0 : i32
    %c0_i32_0 = arith.constant 0 : i32
    return %arg0, %c0_i32 : i32, i32
  }
  func.func @transform_1(%arg0: i32) -> (i32, i32) {
    %c0_i32 = arith.constant 0 : i32
    %c0_i32_0 = arith.constant 0 : i32
    %c0_i32_1 = arith.constant 0 : i32
    return %c0_i32, %c0_i32_0 : i32, i32
  }
  func.func @transform_2(%arg0: i32) -> (i32, i32) {
    %c0_i32 = arith.constant 0 : i32
    %c0_i32_0 = arith.constant 0 : i32
    %c0_i32_1 = arith.constant 0 : i32
    return %c0_i32, %c0_i32_0 : i32, i32
  }
  func.func @transform_3(%arg0: i32) -> (i32, i32) {
    %c0_i32 = arith.constant 0 : i32
    %c0_i32_0 = arith.constant 0 : i32
    %c0_i32_1 = arith.constant 0 : i32
    return %c0_i32, %c0_i32_0 : i32, i32
  }
  func.func @transform_4(%arg0: i32) -> (i32, i32) {
    %c0_i32 = arith.constant 0 : i32
    %c0_i32_0 = arith.constant 0 : i32
    %c0_i32_1 = arith.constant 0 : i32
    return %c0_i32, %c0_i32_0 : i32, i32
  }
  func.func @transform_5(%arg0: i32) -> (i32, i32) {
    %c0_i32 = arith.constant 0 : i32
    %c0_i32_0 = arith.constant 0 : i32
    %c0_i32_1 = arith.constant 0 : i32
    return %c0_i32, %c0_i32_0 : i32, i32
  }
  func.func @transform_6(%arg0: i32) -> (i32, i32) {
    %c0_i32 = arith.constant 0 : i32
    %c0_i32_0 = arith.constant 0 : i32
    %c0_i32_1 = arith.constant 0 : i32
    return %c0_i32, %c0_i32_0 : i32, i32
  }
  func.func @transform_7(%arg0: i32) -> (i32, i32, i32) {
    %c0_i32 = arith.constant 0 : i32
    %c0_i32_0 = arith.constant 0 : i32
    %c0_i32_1 = arith.constant 0 : i32
    return %arg0, %c0_i32, %c0_i32_0 : i32, i32, i32
  }
}

</mosaic_0001>

<llo_original>
// kernel: tpu_custom_call.1
$region0: #{tpu_custom_call.1}
  #allocation0 [shape = 'u32[]', space=smem, size = 0x4, offset = 0x4, fixed_abs, tag = 'smem constant byte address 0x4 - core index']
  #allocation1 [shape = 'u32[144,128]{1,0:T(1,128)}', space=vmem, size = 0x12000, scoped, tag = 'internal scratch']
  #allocation2 [shape = 'f32[1,1]{1,0:T(1,128)S(6)}', space=smem, size = 0x200, scoped, tag = 'scoped memory for tpu_custom_call.1']
  %s0 = inlined_call_operand.vmem [shape: f32[300,27], index: 0, kind: input, shape index: {}]
  %s1 = inlined_call_operand.vmem [shape: f32[32,27], index: 1, kind: input, shape index: {}]
  %s2 = inlined_call_operand.vmem [shape: f32[32,1], index: 2, kind: input, shape index: {}]
  %s3 = inlined_call_operand.vmem [shape: f32[32,32], index: 3, kind: input, shape index: {}]
  %s4 = inlined_call_operand.vmem [shape: f32[32,1], index: 4, kind: input, shape index: {}]
  %s5 = inlined_call_operand.vmem [shape: f32[32,1], index: 5, kind: input, shape index: {}]
  %s6 = inlined_call_operand.<no memory space> [shape: f32[1,1], index: 6, kind: input, shape index: {}]
  %s7 = inlined_call_operand.hbm [shape: f32[2,1,152], index: 7, kind: output, shape index: {}]
  %s8 = sld [smem:[#allocation0]]
  $region61: #{tpu_custom_call.1} parent=0
    _
  %s10 = ssub.s32 1, %s8
  %s11 = scalar_select 0, %s10, %s8
  %12 = sst [smem:[#allocation2]] %s6
  $region1: #{tpu_custom_call.1} parent=0
    #allocation3 [shape = 'u8[2048]{0}', space=vmem, size = 0x800, scoped, tag = 'output window, operand 0']
    #allocation4 [shape = 's32[2]{0}', space=sflag, size = 0x8, scoped, tag = 'scoped memory for tpu_custom_call.1']
    %13 = vsyncpa [#allocation4], 0
    %s14 = scalar_lea.sflag [#allocation4], 1
    %15 = vsyncpa %s14, 0
    loop: start=0, step=1, limit=4
    $region2: #{tpu_custom_call.1} parent=1 // loop_pre_header
      _
    $region3: #{tpu_custom_call.1} parent=1 // loop_header
      %s17 = sphi 0, %s21
      %p18 = scmp.ge.s32.totalorder %s17, 4
      %s27 = sphi 0, %s29
      %s30 = sphi 0, %s27
      %s31 = sphi 0, %s30
      %s47 = sphi 0, %s31
      %s51 = sphi 0, %s51
      %s53 = sphi 0, %s51
      %s54 = sphi 0, %s53
      %s68 = sphi 0, %s54
      %s72 = sphi 0, %s72
      %s74 = sphi 0, %s72
      %s75 = sphi 0, %s74
      %s89 = sphi 0, %s75
      %s93 = sphi 0, %s93
      %s95 = sphi 0, %s93
      %s96 = sphi 0, %s95
      %s110 = sphi 0, %s96
      %s114 = sphi 0, %s114
      %s116 = sphi 0, %s114
      %s117 = sphi 0, %s116
      %s131 = sphi 0, %s117
      %s135 = sphi 0, %s135
      %s137 = sphi 0, %s135
      %s138 = sphi 0, %s137
      %s152 = sphi 0, %s138
      %s156 = sphi 0, %s156
      %s158 = sphi 0, %s156
      %s159 = sphi 0, %s158
      %s173 = sphi 0, %s159
      %s179 = sphi 0, %s181
      %s182 = sphi 0, %s179
      %s183 = sphi 0, %s182
      %s199 = sphi 0, %s183
    $region4: #{tpu_custom_call.1} parent=1 // loop_header_branch
      %20 = sbr.rel (%p18) target = $region8
    $region5: #{tpu_custom_call.1} parent=1 // loop_body
      %s22 = ssub.s32 %s17, 1
      %s23 = ssub.s32 %s17, 2
      %s24 = sadd.s32 %s17, 1
      %s25 = ssub.s32 %s17, %s24
      %p26 = scmp.eq.s32.totalorder %s25, 0
      %s28 = sadd.s32 %s27, 1
      %s29 = scalar_select %p26, %s27, %s28
      %p32 = pneg %p26
      %p33 = scmp.eq.s32.totalorder %s17, 1
      %p34 = por %p32, %p33
      %p35 = scmp.ne.s32.totalorder %s27, %s30
      %p36 = scmp.eq.s32.totalorder %s17, 0
      %p37 = por %p35, %p36
      %p38 = scmp.ne.s32.totalorder %s27, %s30
      %p39 = scmp.eq.s32.totalorder %s22, 1
      %p40 = por %p38, %p39
      %p41 = scmp.ne.s32.totalorder %s30, %s31
      %p42 = scmp.eq.s32.totalorder %s22, 0
      %p43 = por %p41, %p42
      %p44 = scmp.ne.s32.totalorder %s30, %s31
      %p45 = scmp.eq.s32.totalorder %s23, 1
      %p46 = por %p44, %p45
      %p48 = scmp.ne.s32.totalorder %s31, %s47
      %p49 = scmp.eq.s32.totalorder %s23, 0
      %p50 = por %p48, %p49
      %s52 = sadd.s32 %s51, 1
      %p55 = scmp.eq.s32.totalorder %s17, 1
      %p56 = scmp.ne.s32.totalorder %s51, %s53
      %p57 = scmp.eq.s32.totalorder %s17, 0
      %p58 = por %p56, %p57
      %p59 = scmp.ne.s32.totalorder %s51, %s53
      %p60 = scmp.eq.s32.totalorder %s22, 1
      %p61 = por %p59, %p60
      %p62 = scmp.ne.s32.totalorder %s53, %s54
      %p63 = scmp.eq.s32.totalorder %s22, 0
      %p64 = por %p62, %p63
      %p65 = scmp.ne.s32.totalorder %s53, %s54
      %p66 = scmp.eq.s32.totalorder %s23, 1
      %p67 = por %p65, %p66
      %p69 = scmp.ne.s32.totalorder %s54, %s68
      %p70 = scmp.eq.s32.totalorder %s23, 0
      %p71 = por %p69, %p70
      %s73 = sadd.s32 %s72, 1
      %p76 = scmp.eq.s32.totalorder %s17, 1
      %p77 = scmp.ne.s32.totalorder %s72, %s74
      %p78 = scmp.eq.s32.totalorder %s17, 0
      %p79 = por %p77, %p78
      %p80 = scmp.ne.s32.totalorder %s72, %s74
      %p81 = scmp.eq.s32.totalorder %s22, 1
      %p82 = por %p80, %p81
      %p83 = scmp.ne.s32.totalorder %s74, %s75
      %p84 = scmp.eq.s32.totalorder %s22, 0
      %p85 = por %p83, %p84
      %p86 = scmp.ne.s32.totalorder %s74, %s75
      %p87 = scmp.eq.s32.totalorder %s23, 1
      %p88 = por %p86, %p87
      %p90 = scmp.ne.s32.totalorder %s75, %s89
      %p91 = scmp.eq.s32.totalorder %s23, 0
      %p92 = por %p90, %p91
      %s94 = sadd.s32 %s93, 1
      %p97 = scmp.eq.s32.totalorder %s17, 1
      %p98 = scmp.ne.s32.totalorder %s93, %s95
      %p99 = scmp.eq.s32.totalorder %s17, 0
      %p100 = por %p98, %p99
      %p101 = scmp.ne.s32.totalorder %s93, %s95
      %p102 = scmp.eq.s32.totalorder %s22, 1
      %p103 = por %p101, %p102
      %p104 = scmp.ne.s32.totalorder %s95, %s96
      %p105 = scmp.eq.s32.totalorder %s22, 0
      %p106 = por %p104, %p105
      %p107 = scmp.ne.s32.totalorder %s95, %s96
      %p108 = scmp.eq.s32.totalorder %s23, 1
      %p109 = por %p107, %p108
      %p111 = scmp.ne.s32.totalorder %s96, %s110
      %p112 = scmp.eq.s32.totalorder %s23, 0
      %p113 = por %p111, %p112
      %s115 = sadd.s32 %s114, 1
      %p118 = scmp.eq.s32.totalorder %s17, 1
      %p119 = scmp.ne.s32.totalorder %s114, %s116
      %p120 = scmp.eq.s32.totalorder %s17, 0
      %p121 = por %p119, %p120
      %p122 = scmp.ne.s32.totalorder %s114, %s116
      %p123 = scmp.eq.s32.totalorder %s22, 1
      %p124 = por %p122, %p123
      %p125 = scmp.ne.s32.totalorder %s116, %s117
      %p126 = scmp.eq.s32.totalorder %s22, 0
      %p127 = por %p125, %p126
      %p128 = scmp.ne.s32.totalorder %s116, %s117
      %p129 = scmp.eq.s32.totalorder %s23, 1
      %p130 = por %p128, %p129
      %p132 = scmp.ne.s32.totalorder %s117, %s131
      %p133 = scmp.eq.s32.totalorder %s23, 0
      %p134 = por %p132, %p133
      %s136 = sadd.s32 %s135, 1
      %p139 = scmp.eq.s32.totalorder %s17, 1
      %p140 = scmp.ne.s32.totalorder %s135, %s137
      %p141 = scmp.eq.s32.totalorder %s17, 0
      %p142 = por %p140, %p141
      %p143 = scmp.ne.s32.totalorder %s135, %s137
      %p144 = scmp.eq.s32.totalorder %s22, 1
      %p145 = por %p143, %p144
      %p146 = scmp.ne.s32.totalorder %s137, %s138
      %p147 = scmp.eq.s32.totalorder %s22, 0
      %p148 = por %p146, %p147
      %p149 = scmp.ne.s32.totalorder %s137, %s138
      %p150 = scmp.eq.s32.totalorder %s23, 1
      %p151 = por %p149, %p150
      %p153 = scmp.ne.s32.totalorder %s138, %s152
      %p154 = scmp.eq.s32.totalorder %s23, 0
      %p155 = por %p153, %p154
      %s157 = sadd.s32 %s156, 1
      %p160 = scmp.eq.s32.totalorder %s17, 1
      %p161 = scmp.ne.s32.totalorder %s156, %s158
      %p162 = scmp.eq.s32.totalorder %s17, 0
      %p163 = por %p161, %p162
      %p164 = scmp.ne.s32.totalorder %s156, %s158
      %p165 = scmp.eq.s32.totalorder %s22, 1
      %p166 = por %p164, %p165
      %p167 = scmp.ne.s32.totalorder %s158, %s159
      %p168 = scmp.eq.s32.totalorder %s22, 0
      %p169 = por %p167, %p168
      %p170 = scmp.ne.s32.totalorder %s158, %s159
      %p171 = scmp.eq.s32.totalorder %s23, 1
      %p172 = por %p170, %p171
      %p174 = scmp.ne.s32.totalorder %s159, %s173
      %p175 = scmp.eq.s32.totalorder %s23, 0
      %p176 = por %p174, %p175
      %s177 = ssub.s32 %s17, %s24
      %p178 = scmp.eq.s32.totalorder %s177, 0
      %s180 = sadd.s32 %s179, 1
      %s181 = scalar_select %p178, %s179, %s180
      %p184 = pneg %p178
      %p185 = scmp.eq.s32.totalorder %s17, 1
      %p186 = por %p184, %p185
      %p187 = scmp.ne.s32.totalorder %s179, %s182
      %p188 = scmp.eq.s32.totalorder %s17, 0
      %p189 = por %p187, %p188
      %p190 = scmp.ne.s32.totalorder %s179, %s182
      %p191 = scmp.eq.s32.totalorder %s22, 1
      %p192 = por %p190, %p191
      %p193 = scmp.ne.s32.totalorder %s182, %s183
      %p194 = scmp.eq.s32.totalorder %s22, 0
      %p195 = por %p193, %p194
      %p196 = scmp.ne.s32.totalorder %s182, %s183
      %p197 = scmp.eq.s32.totalorder %s23, 1
      %p198 = por %p196, %p197
      %p200 = scmp.ne.s32.totalorder %s183, %s199
      %p201 = scmp.eq.s32.totalorder %s23, 0
      %p202 = por %p200, %p201
      %p203 = scmp.le.s32.totalorder 1, %s17
      %p204 = scmp.lt.s32.totalorder %s17, 3
      %p205 = pnand %p203, %p204
      %p206 = pneg %p205
      // Predicated region
      $region9: #{tpu_custom_call.1} parent=5 // pred_check
        _
      $region10: #{tpu_custom_call.1} parent=5 // pred_check_branch
        %208 = sbr.rel (%p205) target = $region12
      $region11: #{tpu_custom_call.1} parent=5 // pred_region
        %s209 = ssub.s32 %s17, 1
        // Predicated region
        $region13: #{tpu_custom_call.1} parent=11 // pred_check
          %p210 = pneg %p64
        $region14: #{tpu_custom_call.1} parent=11 // pred_check_branch
          %212 = sbr.rel (%p210) target = $region16
        $region15: #{tpu_custom_call.1} parent=11 // pred_region
          _
        $region16: #{tpu_custom_call.1} parent=11 // pred_fallthru
          _
        // Predicated region
        $region17: #{tpu_custom_call.1} parent=11 // pred_check
          %p213 = pneg %p85
        $region18: #{tpu_custom_call.1} parent=11 // pred_check_branch
          %215 = sbr.rel (%p213) target = $region20
        $region19: #{tpu_custom_call.1} parent=11 // pred_region
          _
        $region20: #{tpu_custom_call.1} parent=11 // pred_fallthru
          _
        // Predicated region
        $region21: #{tpu_custom_call.1} parent=11 // pred_check
          %p216 = pneg %p106
        $region22: #{tpu_custom_call.1} parent=11 // pred_check_branch
          %218 = sbr.rel (%p216) target = $region24
        $region23: #{tpu_custom_call.1} parent=11 // pred_region
          _
        $region24: #{tpu_custom_call.1} parent=11 // pred_fallthru
          _
        // Predicated region
        $region25: #{tpu_custom_call.1} parent=11 // pred_check
          %p219 = pneg %p127
        $region26: #{tpu_custom_call.1} parent=11 // pred_check_branch
          %221 = sbr.rel (%p219) target = $region28
        $region27: #{tpu_custom_call.1} parent=11 // pred_region
          _
        $region28: #{tpu_custom_call.1} parent=11 // pred_fallthru
          _
        // Predicated region
        $region29: #{tpu_custom_call.1} parent=11 // pred_check
          %p222 = pneg %p148
        $region30: #{tpu_custom_call.1} parent=11 // pred_check_branch
          %224 = sbr.rel (%p222) target = $region32
        $region31: #{tpu_custom_call.1} parent=11 // pred_region
          _
        $region32: #{tpu_custom_call.1} parent=11 // pred_fallthru
          _
        // Predicated region
        $region33: #{tpu_custom_call.1} parent=11 // pred_check
          %p225 = pneg %p169
        $region34: #{tpu_custom_call.1} parent=11 // pred_check_branch
          %227 = sbr.rel (%p225) target = $region36
        $region35: #{tpu_custom_call.1} parent=11 // pred_region
          _
        $region36: #{tpu_custom_call.1} parent=11 // pred_fallthru
          _
      $region12: #{tpu_custom_call.1} parent=5 // pred_fallthru
        _
      %p228 = scmp.lt.s32.totalorder %s17, 2
      // Predicated region
      $region37: #{tpu_custom_call.1} parent=5 // pred_check
        %p229 = pneg %p228
      $region38: #{tpu_custom_call.1} parent=5 // pred_check_branch
        %231 = sbr.rel (%p229) target = $region40
      $region39: #{tpu_custom_call.1} parent=5 // pred_region
        // Predicated region
        $region41: #{tpu_custom_call.1} parent=39 // pred_check
          %p232 = pneg %p37
        $region42: #{tpu_custom_call.1} parent=39 // pred_check_branch
          %234 = sbr.rel (%p232) target = $region44
        $region43: #{tpu_custom_call.1} parent=39 // pred_region
          %s235 = smul.u32 19, %s17
          %p236 = scmp.lt.s32.totalorder %s235, 37
          %s237 = scalar_select %p236, %s235, 37
          %s238 = smul.addr %s237, 8
          %s239 = scalar_lea.vmem %s0, %s238
          %s240 = smul.u32 19, %s17
        $region44: #{tpu_custom_call.1} parent=39 // pred_fallthru
          _
      $region40: #{tpu_custom_call.1} parent=5 // pred_fallthru
        _
      %p241 = scmp.le.s32.totalorder 1, %s17
      %p242 = scmp.lt.s32.totalorder %s17, 3
      %p243 = pnand %p241, %p242
      %p244 = pneg %p243
      // Predicated region
      $region45: #{tpu_custom_call.1} parent=5 // pred_check
        _
      $region46: #{tpu_custom_call.1} parent=5 // pred_check_branch
        %246 = sbr.rel (%p243) target = $region48
      $region47: #{tpu_custom_call.1} parent=5 // pred_region
        %s247 = ssub.s32 %s17, 1
        %s248 = smul.u32 19, %s22
        %p249 = scmp.lt.s32.totalorder %s248, 37
        %s250 = scalar_select %p249, %s248, 37
        %s251 = smul.addr %s250, 8
        %s252 = scalar_lea.vmem %s0, %s251
        %p253 = pneg %p43
        %p254 = pneg %p40
        %p255 = pneg %p64
        %p256 = pneg %p61
        %p257 = pneg %p85
        %p258 = pneg %p82
        %p259 = pneg %p106
        %p260 = pneg %p103
        %p261 = pneg %p127
        %p262 = pneg %p124
        %p263 = pneg %p148
        %p264 = pneg %p145
        %p265 = pneg %p169
        %p266 = pneg %p166
        %p267 = pneg %p195
        %p268 = pneg %p192
        %s269 = sand.u32 %s182, 1
        %s270 = scalar_lea.sflag [#allocation4], %s269
        %s271 = sand.u32 %s182, 1
        %s272 = smul.addr %s271, 2
        %s273 = scalar_lea.vmem [#allocation3], %s272
        %s274 = smul.u32 19, %s22
        %p275 = scmp.lt.s32.totalorder %s274, 37
        %s276 = scalar_select %p275, %s274, 37
        %s277 = smul.addr %s276, 8
        %s278 = scalar_lea.vmem %s0, %s277
        %s279 = smul.u32 19, %s22
        %v280 = vld [vmem:[%s278] sm:$0xff]
        %v281 = vld [vmem:[%s278 + $0x8] sm:$0xff]
        %v282 = vld [vmem:[%s278 + $0x10] sm:$0xff]
        %v283 = vld [vmem:[%s278 + $0x18] sm:$0xff]
        %v284 = vld [vmem:[%s278 + $0x20] sm:$0xff]
        %v285 = vld [vmem:[%s278 + $0x28] sm:$0xff]
        %v286 = vld [vmem:[%s278 + $0x30] sm:$0xff]
        %v287 = vld [vmem:[%s278 + $0x38] sm:$0xff]
        %v288 = vld [vmem:[%s278 + $0x40] sm:$0xff]
        %v289 = vld [vmem:[%s278 + $0x48] sm:$0xff]
        %v290 = vld [vmem:[%s278 + $0x50] sm:$0xff]
        %v291 = vld [vmem:[%s278 + $0x58] sm:$0xff]
        %v292 = vld [vmem:[%s278 + $0x60] sm:$0xff]
        %v293 = vld [vmem:[%s278 + $0x68] sm:$0xff]
        %v294 = vld [vmem:[%s278 + $0x70] sm:$0xff]
        %v295 = vld [vmem:[%s278 + $0x78] sm:$0xff]
        %v296 = vld [vmem:[%s278 + $0x80] sm:$0xff]
        %v297 = vld [vmem:[%s278 + $0x88] sm:$0xff]
        %v298 = vld [vmem:[%s278 + $0x90] sm:$0xff]
        %v299 = vld [vmem:[%s1] sm:$0xff]
        %v300 = vld [vmem:[%s1 + $0x8] sm:$0xff]
        %v301 = vld [vmem:[%s1 + $0x10] sm:$0xff]
        %v302 = vld [vmem:[%s1 + $0x18] sm:$0xff]
        %v303 = vld [vmem:[%s2] sm:$0xff]
        %v304 = vld [vmem:[%s2 + $0x8] sm:$0xff]
        %v305 = vld [vmem:[%s2 + $0x10] sm:$0xff]
        %v306 = vld [vmem:[%s2 + $0x18] sm:$0xff]
        %308 = vset.pattern.permute.xlu0 0
        %309 = vperm.xlu0 %308, %v303
        %v310 = vpop.permute.xlu0 %309
        %313 = vset.pattern.permute.xlu0 0
        %314 = vperm.xlu0 %313, %v304
        %v315 = vpop.permute.xlu0 %314
        %318 = vset.pattern.permute.xlu0 0
        %319 = vperm.xlu0 %318, %v305
        %v320 = vpop.permute.xlu0 %319
        %323 = vset.pattern.permute.xlu0 0
        %324 = vperm.xlu0 %323, %v306
        %v325 = vpop.permute.xlu0 %324
        %vm327 = vcmask 220160
        %v329 = vsel %vm327, %v299, 0
        %v332 = vsel %vm327, %v300, 0
        %v335 = vsel %vm327, %v301, 0
        %v338 = vsel %vm327, %v302, 0
        %v341 = vsel %vm327, %v280, 0
        %v344 = vsel %vm327, %v281, 0
        %v347 = vsel %vm327, %v282, 0
        %v350 = vsel %vm327, %v283, 0
        %v353 = vsel %vm327, %v284, 0
        %v356 = vsel %vm327, %v285, 0
        %v359 = vsel %vm327, %v286, 0
        %v362 = vsel %vm327, %v287, 0
        %v365 = vsel %vm327, %v288, 0
        %v368 = vsel %vm327, %v289, 0
        %v371 = vsel %vm327, %v290, 0
        %v374 = vsel %vm327, %v291, 0
        %v377 = vsel %vm327, %v292, 0
        %v380 = vsel %vm327, %v293, 0
        %v383 = vsel %vm327, %v294, 0
        %v386 = vsel %vm327, %v295, 0
        %v389 = vsel %vm327, %v296, 0
        %v392 = vsel %vm327, %v297, 0
        %v395 = vsel %vm327, %v298, 0
        %397 = vmatprep.subr.mxu0 0.0
        %398 = vmatpush1.xpose.msra.mxu0 %v341
        %399 = vmatprep.subr.mxu0 0.0
        %400 = vmatpush1.xpose.msra.mxu0 %v344
        %401 = vmatprep.subr.mxu0 0.0
        %402 = vmatpush1.xpose.msra.mxu0 %v347
        %403 = vmatprep.subr.mxu0 0.0
        %404 = vmatpush1.xpose.msra.mxu0 %v350
        %405 = vmatprep.subr.mxu0 0.0
        %406 = vmatpush1.xpose.msra.mxu0 %v353
        %407 = vmatprep.subr.mxu0 0.0
        %408 = vmatpush1.xpose.msra.mxu0 %v356
        %409 = vmatprep.subr.mxu0 0.0
        %410 = vmatpush1.xpose.msra.mxu0 %v359
        %411 = vmatprep.subr.mxu0 0.0
        %412 = vmatpush1.xpose.msra.mxu0 %v362
        %413 = vmatprep.subr.mxu0 0.0
        %414 = vmatpush1.xpose.msra.mxu0 %v365
        %415 = vmatprep.subr.mxu0 0.0
        %416 = vmatpush1.xpose.msra.mxu0 %v368
        %417 = vmatprep.subr.mxu0 0.0
        %418 = vmatpush1.xpose.msra.mxu0 %v371
        %419 = vmatprep.subr.mxu0 0.0
        %420 = vmatpush1.xpose.msra.mxu0 %v374
        %421 = vmatprep.subr.mxu0 0.0
        %422 = vmatpush1.xpose.msra.mxu0 %v377
        %423 = vmatprep.subr.mxu0 0.0
        %424 = vmatpush1.xpose.msra.mxu0 %v380
        %425 = vmatprep.subr.mxu0 0.0
        %426 = vmatpush1.xpose.msra.mxu0 %v383
        %427 = vmatprep.subr.mxu0 0.0
        %428 = vmatpush1.xpose.msra.mxu0 %v386
        %429 = vmatprep.subr.mxu0 0.0
        %430 = vmatpush1.xpose.msra.mxu0 %v389
        %431 = vmatprep.subr.mxu0 0.0
        %432 = vmatpush1.xpose.msra.mxu0 %v392
        %433 = vmatprep.subr.mxu0 0.0
        %434 = vmatpush1.xpose.msra.mxu0 %v395
        %435 = vmatprep.subr.mxu0 0.0
        %436 = vmatpush1.xpose.msra.mxu0 0.0
        %437 = vmatprep.subr.mxu0 0.0
        %438 = vmatpush1.xpose.msra.mxu0 0.0
        %439 = vmatprep.subr.mxu0 0.0
        %440 = vmatpush1.xpose.msra.mxu0 0.0
        %441 = vmatprep.subr.mxu0 0.0
        %442 = vmatpush1.xpose.msra.mxu0 0.0
        %443 = vmatprep.subr.mxu0 0.0
        %444 = vmatpush1.xpose.msra.mxu0 0.0
        %445 = vmatprep.subr.mxu0 0.0
        %446 = vmatpush1.xpose.msra.mxu0 0.0
        %447 = vmatprep.subr.mxu0 0.0
        %448 = vmatpush1.xpose.msra.mxu0 0.0
        %449 = vmatprep.subr.mxu0 0.0
        %450 = vmatpush1.xpose.msra.mxu0 0.0
        %451 = vmatprep.subr.mxu0 0.0
        %452 = vmatpush1.xpose.msra.mxu0 0.0
        %453 = vmatprep.subr.mxu0 0.0
        %454 = vmatpush1.xpose.msra.mxu0 0.0
        %455 = vmatprep.subr.mxu0 0.0
        %456 = vmatpush1.xpose.msra.mxu0 0.0
        %457 = vmatprep.subr.mxu0 0.0
        %458 = vmatpush1.xpose.msra.mxu0 0.0
        %459 = vmatprep.subr.mxu0 0.0
        %460 = vmatpush1.xpose.msra.mxu0 0.0
        %461 = vmatprep.mubr.f32.mxu0 0.0
        %462 = vmatmul.mubr.f32.gmra.mrb[0].mxu0 %v329
        %v463 = vpop.f32.mrb[0].mxu0
        %v464 = vadd.f32 %v310, %v463
        %v465 = vpop.f32.mrb[0].mxu0
        %v466 = vadd.f32 %v310, %v465
        %467 = vmatprep.mubr.f32.mxu0 0.0
        %468 = vmatmul.mubr.f32.gmra.mrb[0].mxu0 %v332
        %v469 = vpop.f32.mrb[0].mxu0
        %v470 = vadd.f32 %v315, %v469
        %v471 = vpop.f32.mrb[0].mxu0
        %v472 = vadd.f32 %v315, %v471
        %473 = vmatprep.mubr.f32.mxu0 0.0
        %474 = vmatmul.mubr.f32.gmra.mrb[0].mxu0 %v335
        %v475 = vpop.f32.mrb[0].mxu0
        %v476 = vadd.f32 %v320, %v475
        %v477 = vpop.f32.mrb[0].mxu0
        %v478 = vadd.f32 %v320, %v477
        %479 = vmatprep.mubr.f32.mxu0 0.0
        %480 = vmatmul.mubr.f32.gmra.mrb[0].mxu0 %v338
        %v481 = vpop.f32.mrb[0].mxu0
        %v482 = vadd.f32 %v325, %v481
        %v483 = vpop.f32.mrb[0].mxu0
        %v484 = vadd.f32 %v325, %v483
        %485 = vdwg.mxu0
        %v486 = vtanh.pop %v464
        %v487 = vtanh.pop %v466
        %v488 = vtanh.pop %v470
        %v489 = vtanh.pop %v472
        %v490 = vtanh.pop %v476
        %v491 = vtanh.pop %v478
        %v492 = vtanh.pop %v482
        %v493 = vtanh.pop %v484
        %v494 = vld [vmem:[%s3] sm:$0xff]
        %v495 = vld [vmem:[%s3 + $0x8] sm:$0xff]
        %v496 = vld [vmem:[%s3 + $0x10] sm:$0xff]
        %v497 = vld [vmem:[%s3 + $0x18] sm:$0xff]
        %v498 = vld [vmem:[%s4] sm:$0xff]
        %v499 = vld [vmem:[%s4 + $0x8] sm:$0xff]
        %v500 = vld [vmem:[%s4 + $0x10] sm:$0xff]
        %v501 = vld [vmem:[%s4 + $0x18] sm:$0xff]
        %503 = vset.pattern.permute.xlu0 0
        %504 = vperm.xlu0 %503, %v498
        %v505 = vpop.permute.xlu0 %504
        %508 = vset.pattern.permute.xlu0 0
        %509 = vperm.xlu0 %508, %v499
        %v510 = vpop.permute.xlu0 %509
        %513 = vset.pattern.permute.xlu0 0
        %514 = vperm.xlu0 %513, %v500
        %v515 = vpop.permute.xlu0 %514
        %518 = vset.pattern.permute.xlu0 0
        %519 = vperm.xlu0 %518, %v501
        %v520 = vpop.permute.xlu0 %519
        %vm522 = vcmask 261120
        %v524 = vsel %vm522, %v494, 0
        %v527 = vsel %vm522, %v495, 0
        %v530 = vsel %vm522, %v496, 0
        %v533 = vsel %vm522, %v497, 0
        %535 = vmatprep.subr.mxu0 %v487
        %536 = vmatpush1.msra.mxu0 %v486
        %537 = vmatprep.subr.mxu0 %v489
        %538 = vmatpush1.msra.mxu0 %v488
        %539 = vmatprep.subr.mxu0 %v491
        %540 = vmatpush1.msra.mxu0 %v490
        %541 = vmatprep.subr.mxu0 %v493
        %542 = vmatpush1.msra.mxu0 %v492
        %543 = vmatprep.subr.mxu0 0.0
        %544 = vmatpush1.msra.mxu0 0.0
        %545 = vmatprep.subr.mxu0 0.0
        %546 = vmatpush1.msra.mxu0 0.0
        %547 = vmatprep.subr.mxu0 0.0
        %548 = vmatpush1.msra.mxu0 0.0
        %549 = vmatprep.subr.mxu0 0.0
        %550 = vmatpush1.msra.mxu0 0.0
        %551 = vmatprep.subr.mxu0 0.0
        %552 = vmatpush1.msra.mxu0 0.0
        %553 = vmatprep.subr.mxu0 0.0
        %554 = vmatpush1.msra.mxu0 0.0
        %555 = vmatprep.subr.mxu0 0.0
        %556 = vmatpush1.msra.mxu0 0.0
        %557 = vmatprep.subr.mxu0 0.0
        %558 = vmatpush1.msra.mxu0 0.0
        %559 = vmatprep.subr.mxu0 0.0
        %560 = vmatpush1.msra.mxu0 0.0
        %561 = vmatprep.subr.mxu0 0.0
        %562 = vmatpush1.msra.mxu0 0.0
        %563 = vmatprep.subr.mxu0 0.0
        %564 = vmatpush1.msra.mxu0 0.0
        %565 = vmatprep.subr.mxu0 0.0
        %566 = vmatpush1.msra.mxu0 0.0
        %567 = vmatprep.subr.mxu0 0.0
        %568 = vmatpush1.msra.mxu0 0.0
        %569 = vmatprep.subr.mxu0 0.0
        %570 = vmatpush1.msra.mxu0 0.0
        %571 = vmatprep.subr.mxu0 0.0
        %572 = vmatpush1.msra.mxu0 0.0
        %573 = vmatprep.subr.mxu0 0.0
        %574 = vmatpush1.msra.mxu0 0.0
        %575 = vmatprep.subr.mxu0 0.0
        %576 = vmatpush1.msra.mxu0 0.0
        %577 = vmatprep.subr.mxu0 0.0
        %578 = vmatpush1.msra.mxu0 0.0
        %579 = vmatprep.subr.mxu0 0.0
        %580 = vmatpush1.msra.mxu0 0.0
        %581 = vmatprep.subr.mxu0 0.0
        %582 = vmatpush1.msra.mxu0 0.0
        %583 = vmatprep.subr.mxu0 0.0
        %584 = vmatpush1.msra.mxu0 0.0
        %585 = vmatprep.subr.mxu0 0.0
        %586 = vmatpush1.msra.mxu0 0.0
        %587 = vmatprep.subr.mxu0 0.0
        %588 = vmatpush1.msra.mxu0 0.0
        %589 = vmatprep.subr.mxu0 0.0
        %590 = vmatpush1.msra.mxu0 0.0
        %591 = vmatprep.subr.mxu0 0.0
        %592 = vmatpush1.msra.mxu0 0.0
        %593 = vmatprep.subr.mxu0 0.0
        %594 = vmatpush1.msra.mxu0 0.0
        %595 = vmatprep.subr.mxu0 0.0
        %596 = vmatpush1.msra.mxu0 0.0
        %597 = vmatprep.subr.mxu0 0.0
        %598 = vmatpush1.msra.mxu0 0.0
        %599 = vmatprep.mubr.f32.mxu0 0.0
        %600 = vmatmul.mubr.f32.gmra.mrb[0].mxu0 %v524
        %v601 = vpop.f32.mrb[0].mxu0
        %v602 = vadd.f32 %v505, %v601
        %v603 = vpop.f32.mrb[0].mxu0
        %v604 = vadd.f32 %v505, %v603
        %605 = vmatprep.mubr.f32.mxu0 0.0
        %606 = vmatmul.mubr.f32.gmra.mrb[0].mxu0 %v527
        %v607 = vpop.f32.mrb[0].mxu0
        %v608 = vadd.f32 %v510, %v607
        %v609 = vpop.f32.mrb[0].mxu0
        %v610 = vadd.f32 %v510, %v609
        %611 = vmatprep.mubr.f32.mxu0 0.0
        %612 = vmatmul.mubr.f32.gmra.mrb[0].mxu0 %v530
        %v613 = vpop.f32.mrb[0].mxu0
        %v614 = vadd.f32 %v515, %v613
        %v615 = vpop.f32.mrb[0].mxu0
        %v616 = vadd.f32 %v515, %v615
        %617 = vmatprep.mubr.f32.mxu0 0.0
        %618 = vmatmul.mubr.f32.gmra.mrb[0].mxu0 %v533
        %v619 = vpop.f32.mrb[0].mxu0
        %v620 = vadd.f32 %v520, %v619
        %v621 = vpop.f32.mrb[0].mxu0
        %v622 = vadd.f32 %v520, %v621
        %623 = vdwg.mxu0
        %v624 = vtanh.pop %v602
        %v625 = vtanh.pop %v604
        %v626 = vtanh.pop %v608
        %v627 = vtanh.pop %v610
        %v628 = vtanh.pop %v614
        %v629 = vtanh.pop %v616
        %v630 = vtanh.pop %v620
        %v631 = vtanh.pop %v622
        %v632 = vld [vmem:[%s5] sm:$0xff]
        %v633 = vld [vmem:[%s5 + $0x8] sm:$0xff]
        %v634 = vld [vmem:[%s5 + $0x10] sm:$0xff]
        %v635 = vld [vmem:[%s5 + $0x18] sm:$0xff]
        %637 = vset.pattern.permute.xlu0 0
        %638 = vperm.xlu0 %637, %v632
        %v639 = vpop.permute.xlu0 %638
        %642 = vset.pattern.permute.xlu0 0
        %643 = vperm.xlu0 %642, %v633
        %v644 = vpop.permute.xlu0 %643
        %647 = vset.pattern.permute.xlu0 0
        %648 = vperm.xlu0 %647, %v634
        %v649 = vpop.permute.xlu0 %648
        %652 = vset.pattern.permute.xlu0 0
        %653 = vperm.xlu0 %652, %v635
        %v654 = vpop.permute.xlu0 %653
        %v656 = vmul.f32 %v624, %v639
        %v657 = vmul.f32 %v625, %v639
        %v658 = vmul.f32 %v626, %v644
        %v659 = vmul.f32 %v627, %v644
        %v660 = vmul.f32 %v628, %v649
        %v661 = vmul.f32 %v629, %v649
        %v662 = vmul.f32 %v630, %v654
        %v663 = vmul.f32 %v631, %v654
        %v664 = vadd.f32 %v656, %v658
        %v665 = vadd.f32 %v664, %v660
        %v666 = vadd.f32 %v665, %v662
        %v667 = vrot.slane %v666, 4
        %v668 = vadd.f32 %v666, %v667
        %v669 = vrot.slane %v668, 2
        %v670 = vadd.f32 %v668, %v669
        %v671 = vrot.slane %v670, 1
        %v672 = vadd.f32 %v670, %v671
        %vm673 = vcmask 195584
        %v674 = vsel %vm673, %v657, 0.0
        %v675 = vsel %vm673, %v659, 0.0
        %v676 = vadd.f32 %v674, %v675
        %v677 = vsel %vm673, %v661, 0.0
        %v678 = vadd.f32 %v676, %v677
        %v679 = vsel %vm673, %v663, 0.0
        %v680 = vadd.f32 %v678, %v679
        %v681 = vrot.slane %v680, 4
        %v682 = vadd.f32 %v680, %v681
        %v683 = vrot.slane %v682, 2
        %v684 = vadd.f32 %v682, %v683
        %v685 = vrot.slane %v684, 1
        %v686 = vadd.f32 %v684, %v685
        %s687 = sld [smem:[#allocation2]]
        %v688 = vstv %s687
        %v689 = vadd.f32 %v672, %v688
        %v690 = vadd.f32 %v686, %v688
        %v693 = vcombine.low %v689, %v690
        %v695 = vunpack.c.l.s4 1966171168
        %v696 = vunpack.c.0.s8 %v695
        %v697 = vlaneseq
        %v698 = vshrl.u32 %v697, 7
        %v699 = vsub.s32 %v696, %v698
        %v700 = vrot.slane %v693, %v699
        %v702 = vunpack.c.l.s4 1966171168
        %v703 = vunpack.c.0.s8 %v702
        %v704 = vlaneseq
        %v705 = vshrl.u32 %v704, 7
        %v706 = vsub.s32 %v703, %v705
        %v707 = vrot.slane %v700, %v706
        %v709 = vlaneseq
        %vm710 = vcmp.ge.s32.totalorder %v709, 0
        %vm711 = vcmp.lt.s32.totalorder %v709, 152
        %vm712 = vmand %vm710, %vm711
        %713 = vst.msk [vmem:[%s273] sm:$0x3] %vm712, %v707
        %s714 = sand.u32 %s182, 1
        %s715 = scalar_lea.sflag [#allocation4], %s714
        %s716 = sand.u32 %s182, 1
        %s717 = smul.addr %s716, 2
        %s718 = scalar_lea.vmem [#allocation3], %s717
        // Predicated region
        $region49: #{tpu_custom_call.1} parent=47 // pred_check
          %p719 = pneg %p192
        $region50: #{tpu_custom_call.1} parent=47 // pred_check_branch
          %721 = sbr.rel (%p719) target = $region52
        $region51: #{tpu_custom_call.1} parent=47 // pred_region
          %s723 = ssub.s32 32, 32
          %724 = vsyncadd %s715, %s723
          %s725 = smul.addr %s22, 2
          %s726 = smul.addr %s725, 16
          %s727 = scalar_lea.hbm %s7, %s726
          %s729 = sshll.u32 %s718, 4
          %s730 = int_to_ptr.vmem [resolvable:$true] %s729
          %732 = dma.vmem_to_hbm [thread:$0]  %s730, 32, %s727, %s715
        $region52: #{tpu_custom_call.1} parent=47 // pred_fallthru
          _
      $region48: #{tpu_custom_call.1} parent=5 // pred_fallthru
        _
      %p733 = scmp.le.s32.totalorder 2, %s17
      // Predicated region
      $region53: #{tpu_custom_call.1} parent=5 // pred_check
        %p734 = pneg %p733
      $region54: #{tpu_custom_call.1} parent=5 // pred_check_branch
        %736 = sbr.rel (%p734) target = $region56
      $region55: #{tpu_custom_call.1} parent=5 // pred_region
        %s737 = ssub.s32 %s17, 2
        // Predicated region
        $region57: #{tpu_custom_call.1} parent=55 // pred_check
          %p738 = pneg %p198
        $region58: #{tpu_custom_call.1} parent=55 // pred_check_branch
          %740 = sbr.rel (%p738) target = $region60
        $region59: #{tpu_custom_call.1} parent=55 // pred_region
          %s741 = sand.u32 %s183, 1
          %s742 = scalar_lea.sflag [#allocation4], %s741
          %s743 = sand.u32 %s183, 1
          %s744 = smul.addr %s743, 2
          %s745 = scalar_lea.vmem [#allocation3], %s744
          %746 = dma.done %s742, 32
        $region60: #{tpu_custom_call.1} parent=55 // pred_fallthru
          _
      $region56: #{tpu_custom_call.1} parent=5 // pred_fallthru
        _
    $region6: #{tpu_custom_call.1} parent=1 // loop_footer
      %s21 = sadd.s32 1, %s17
    $region7: #{tpu_custom_call.1} parent=1 // loop_footer_branch
      %16 = sbr.rel target = $region3
    $region8: #{tpu_custom_call.1} parent=1 // loop_exit
      _
    %747 = vsyncpa [#allocation4], 1
    %s748 = scalar_lea.sflag [#allocation4], 1
    %749 = vsyncpa %s748, 1

</llo_original>
